<compile_context>
chip_gen: v7x
topology: tpu7x:2x2x1
jax: 0.10.0
libtpu: 0.0.40
codegen_flags: <defaults>
</compile_context>

<pallas_src>
import functools

import jax
import jax.numpy as jnp
from jax import lax
from jax.experimental import pallas as pl
from jax.experimental.pallas import tpu as pltpu


def _hash_u32(x):
    # "lowbias32" integer hash — pure elementwise int ops (VPU), portable.
    x = x ^ (x >> jnp.uint32(16))
    x = x * jnp.uint32(0x7FEB352D)
    x = x ^ (x >> jnp.uint32(15))
    x = x * jnp.uint32(0x846CA68B)
    x = x ^ (x >> jnp.uint32(16))
    return x


def _linear_block_kernel(seed_ref, x_ref, w_ref, b_ref, gamma_ref, beta_ref,
                         o_ref, *, apply_bn, dropout_p, drop_scale, eps,
                         tile_fout):
    # ---- Linear: (N, Fin) . (tile_fout, Fin)^T -> (N, tile_fout) on the MXU ----
    # bf16 operands, f32 accumulate; weight consumed in its (Fout, Fin) layout.
    x = x_ref[...].astype(jnp.bfloat16)
    w = w_ref[...].astype(jnp.bfloat16)
    h = lax.dot_general(
        x, w,
        dimension_numbers=(((1,), (1,)), ((), ())),
        preferred_element_type=jnp.float32)                   # (N, tile_fout) f32
    h = h + b_ref[...]                                         # (1, tile_fout) bcast

    # ---- BatchNorm1d (training mode, biased batch stats); exact because the
    #      full batch axis lives inside every Fout tile. ----
    if apply_bn:
        mean = jnp.mean(h, axis=0, keepdims=True)
        centered = h - mean
        var = jnp.mean(centered * centered, axis=0, keepdims=True)
        h = centered * lax.rsqrt(var + eps)
        h = h * gamma_ref[...] + beta_ref[...]   # dropout 1/(1-p) pre-folded here

    # ---- ReLU ----
    h = jnp.maximum(h, 0.0)

    # ---- Dropout (inverted), stateless hash PRNG keyed on (seed, row, global col) ----
    if dropout_p >= 1.0:
        h = jnp.zeros_like(h)
    elif dropout_p > 0.0:
        j = pl.program_id(0)
        row = lax.broadcasted_iota(jnp.int32, h.shape, 0).astype(jnp.uint32)
        col = (lax.broadcasted_iota(jnp.int32, h.shape, 1)
               + j * tile_fout).astype(jnp.uint32)
        seed = seed_ref[0].astype(jnp.uint32)
        key = (row * jnp.uint32(0x9E3779B1)) ^ (col * jnp.uint32(0x85EBCA77)) ^ seed
        bits = _hash_u32(key)
        threshold = jnp.uint32(min(int(round(dropout_p * 4294967296.0)),
                                   4294967295))
        keep = bits >= threshold                 # P(keep) = 1 - p
        if drop_scale != 1.0:                    # only when scale not folded into BN
            h = h * jnp.float32(drop_scale)
        h = jnp.where(keep, h, 0.0)

    o_ref[...] = h.astype(o_ref.dtype)


def linear_block(x, w, b, gamma=None, beta=None, seed=0, *, do_bn, dropout_p,
                 eps=1e-5, tile_fout=128):
    """Fused LinearBlock forward.

    x:     (N, Fin)   float32
    w:     (Fout, Fin) float32  (PyTorch nn.Linear weight layout, used as-is)
    b:     (Fout,)    float32
    gamma: (Fout,)    float32   BN weight (ignored if BN not applied)
    beta:  (Fout,)    float32   BN bias
    seed:  int                  dropout PRNG seed
    """
    n, fin = x.shape
    fout = w.shape[0]
    dropout_p = float(dropout_p)

    # PyTorch module skips BN when batch size == 1 (forward's `x.shape[0] > 1`).
    apply_bn = bool(do_bn) and n > 1
    # TODO(synk): BatchNorm running_mean/running_var momentum buffers are not
    # maintained (only training-mode batch statistics, which is all forward() uses).

    if gamma is None:
        gamma = jnp.ones((fout,), jnp.float32)
    if beta is None:
        beta = jnp.zeros((fout,), jnp.float32)

    # Fold inverted-dropout scale into the BN affine: relu is positive-homogeneous,
    # so s*relu(bn(h)) == relu(bn(h) with gamma*s, beta*s).
    drop_scale = 1.0
    if 0.0 < dropout_p < 1.0:
        s = 1.0 / (1.0 - dropout_p)
        if apply_bn:
            gamma = gamma * jnp.float32(s)
            beta = beta * jnp.float32(s)
        else:
            drop_scale = s

    # Lane-dense output: pad Fout up to a multiple of the tile (>= 128).
    tile_fout = max(128, int(tile_fout))
    fout_pad = ((fout + tile_fout - 1) // tile_fout) * tile_fout
    pad = fout_pad - fout
    if pad:
        w = jnp.pad(w, ((0, pad), (0, 0)))
        b = jnp.pad(b, (0, pad))
        gamma = jnp.pad(gamma, (0, pad), constant_values=1.0)
        beta = jnp.pad(beta, (0, pad))

    b2 = b.reshape(1, fout_pad).astype(jnp.float32)
    gamma2 = gamma.reshape(1, fout_pad).astype(jnp.float32)
    beta2 = beta.reshape(1, fout_pad).astype(jnp.float32)
    seed_arr = jnp.asarray([seed], dtype=jnp.int32)

    n_tiles = fout_pad // tile_fout

    kernel = functools.partial(
        _linear_block_kernel,
        apply_bn=apply_bn,
        dropout_p=dropout_p,
        drop_scale=float(drop_scale),
        eps=float(eps),
        tile_fout=tile_fout,
    )

    # Grid over Fout tiles only; full batch axis per tile keeps BN stats exact.
    # TODO(synk): for very large Fin, add an Fin grid axis with a VMEM f32
    # accumulator and a pl.when epilogue; Fin is kept whole here.
    grid_spec = pltpu.PrefetchScalarGridSpec(
        num_scalar_prefetch=1,
        grid=(n_tiles,),
        in_specs=[
            pl.BlockSpec((n, fin), lambda j, seed: (0, 0)),          # x (resident)
            pl.BlockSpec((tile_fout, fin), lambda j, seed: (j, 0)),  # weight slab
            pl.BlockSpec((1, tile_fout), lambda j, seed: (0, j)),    # bias
            pl.BlockSpec((1, tile_fout), lambda j, seed: (0, j)),    # BN gamma
            pl.BlockSpec((1, tile_fout), lambda j, seed: (0, j)),    # BN beta
        ],
        out_specs=pl.BlockSpec((n, tile_fout), lambda j, seed: (0, j)),
    )

    out = pl.pallas_call(
        kernel,
        out_shape=jax.ShapeDtypeStruct((n, fout_pad), jnp.float32),
        grid_spec=grid_spec,
        compiler_params=pltpu.CompilerParams(
            dimension_semantics=("parallel",)),
    )(seed_arr, x, w, b2, gamma2, beta2)

    return out[:, :fout] if pad else out


if __name__ == "__main__":
    key = jax.random.PRNGKey(0)
    k_x, k_w, k_b = jax.random.split(key, 3)

    N, F_IN, F_OUT = 8, 32, 64
    DO_BN = True
    DROPOUT_P = 0.2

    x = jax.random.normal(k_x, (N, F_IN), dtype=jnp.float32)

    # PyTorch-like kaiming-uniform init bounds.
    bound = 1.0 / (F_IN ** 0.5)
    w = jax.random.uniform(k_w, (F_OUT, F_IN), minval=-bound, maxval=bound,
                           dtype=jnp.float32)
    b = jax.random.uniform(k_b, (F_OUT,), minval=-bound, maxval=bound,
                           dtype=jnp.float32)
    gamma = jnp.ones((F_OUT,), dtype=jnp.float32)   # BN weight init
    beta = jnp.zeros((F_OUT,), dtype=jnp.float32)   # BN bias init

    out = linear_block(x, w, b, gamma, beta, seed=1234,
                       do_bn=DO_BN, dropout_p=DROPOUT_P)
    jax.block_until_ready(out)
    assert out.shape == (N, F_OUT)
    assert bool(jnp.all(jnp.isfinite(out)))
    assert bool(jnp.all(out >= 0.0))   # ReLU + dropout => non-negative
    print("KERNEL_OK")
</pallas_src>

<mosaic_0001>
module attributes {stable_mosaic.version = 11 : i64} {
  func.func @_linear_block_kernel(%arg0: i32, %arg1: memref<1xi32, #tpu.memory_space<smem>>, %arg2: memref<8x32xf32, #tpu.memory_space<vmem>>, %arg3: memref<128x32xf32, #tpu.memory_space<vmem>>, %arg4: memref<1x128xf32, #tpu.memory_space<vmem>>, %arg5: memref<1x128xf32, #tpu.memory_space<vmem>>, %arg6: memref<1x128xf32, #tpu.memory_space<vmem>>, %arg7: memref<8x128xf32, #tpu.memory_space<vmem>>) attributes {dimension_semantics = [#tpu.dimension_semantics<parallel>], iteration_bounds = array<i64: 1>, scalar_prefetch = 1 : i64, scratch_operands = 0 : i64, tpu.core_type = #tpu.core_type<tc>, window_params = [{pipeline_mode = #tpu.pipeline_mode<synchronous>, transform_indices = @transform_0, window_bounds = array<i64: 8, 32>}, {transform_indices = @transform_1, window_bounds = array<i64: 128, 32>}, {transform_indices = @transform_2, window_bounds = array<i64: 1, 128>}, {transform_indices = @transform_3, window_bounds = array<i64: 1, 128>}, {transform_indices = @transform_4, window_bounds = array<i64: 1, 128>}, {transform_indices = @transform_5, window_bounds = array<i64: 8, 128>}]} {
    %c0 = arith.constant 0 : index
    %c0_0 = arith.constant 0 : index
    %0 = vector.load %arg2[%c0, %c0_0] : memref<8x32xf32, #tpu.memory_space<vmem>>, vector<8x32xf32>
    %1 = arith.truncf %0 : vector<8x32xf32> to vector<8x32xbf16>
    %c0_1 = arith.constant 0 : index
    %c0_2 = arith.constant 0 : index
    %2 = vector.load %arg3[%c0_1, %c0_2] : memref<128x32xf32, #tpu.memory_space<vmem>>, vector<128x32xf32>
    %3 = arith.truncf %2 : vector<128x32xf32> to vector<128x32xbf16>
    %cst = arith.constant dense<0.000000e+00> : vector<8x128xf32>
    %4 = tpu.matmul %1, %3, %cst {dimension_numbers = #tpu.dot_dimension_numbers<[1], [1], [0], [0], [0, 0, 1, 0], [], []>} : vector<8x32xbf16>, vector<128x32xbf16>, vector<8x128xf32> -> vector<8x128xf32>
    %c0_3 = arith.constant 0 : index
    %c0_4 = arith.constant 0 : index
    %5 = vector.load %arg4[%c0_3, %c0_4] : memref<1x128xf32, #tpu.memory_space<vmem>>, vector<1x128xf32>
    %6 = vector.broadcast %5 : vector<1x128xf32> to vector<8x128xf32>
    %7 = arith.addf %4, %6 : vector<8x128xf32>
    %cst_5 = arith.constant dense<0.000000e+00> : vector<128xf32>
    %8 = vector.multi_reduction <add>, %7, %cst_5 [0] : vector<8x128xf32> to vector<128xf32>
    %9 = vector.shape_cast %8 : vector<128xf32> to vector<1x128xf32>
    %cst_6 = arith.constant 8.000000e+00 : f32
    %10 = vector.broadcast %cst_6 : f32 to vector<1x128xf32>
    %11 = arith.divf %9, %10 : vector<1x128xf32>
    %12 = vector.broadcast %11 : vector<1x128xf32> to vector<8x128xf32>
    %13 = arith.subf %7, %12 : vector<8x128xf32>
    %14 = arith.mulf %13, %13 : vector<8x128xf32>
    %cst_7 = arith.constant dense<0.000000e+00> : vector<128xf32>
    %15 = vector.multi_reduction <add>, %14, %cst_7 [0] : vector<8x128xf32> to vector<128xf32>
    %16 = vector.shape_cast %15 : vector<128xf32> to vector<1x128xf32>
    %cst_8 = arith.constant 8.000000e+00 : f32
    %17 = vector.broadcast %cst_8 : f32 to vector<1x128xf32>
    %18 = arith.divf %16, %17 : vector<1x128xf32>
    %cst_9 = arith.constant 9.99999974E-6 : f32
    %19 = vector.broadcast %cst_9 : f32 to vector<1x128xf32>
    %20 = arith.addf %18, %19 : vector<1x128xf32>
    %21 = math.rsqrt %20 : vector<1x128xf32>
    %22 = vector.broadcast %21 : vector<1x128xf32> to vector<8x128xf32>
    %23 = arith.mulf %13, %22 : vector<8x128xf32>
    %c0_10 = arith.constant 0 : index
    %c0_11 = arith.constant 0 : index
    %24 = vector.load %arg5[%c0_10, %c0_11] : memref<1x128xf32, #tpu.memory_space<vmem>>, vector<1x128xf32>
    %25 = vector.broadcast %24 : vector<1x128xf32> to vector<8x128xf32>
    %26 = arith.mulf %23, %25 : vector<8x128xf32>
    %c0_12 = arith.constant 0 : index
    %c0_13 = arith.constant 0 : index
    %27 = vector.load %arg6[%c0_12, %c0_13] : memref<1x128xf32, #tpu.memory_space<vmem>>, vector<1x128xf32>
    %28 = vector.broadcast %27 : vector<1x128xf32> to vector<8x128xf32>
    %29 = arith.addf %26, %28 : vector<8x128xf32>
    %cst_14 = arith.constant 0.000000e+00 : f32
    %30 = vector.broadcast %cst_14 : f32 to vector<8x128xf32>
    %31 = arith.maximumf %29, %30 : vector<8x128xf32>
    %32 = tpu.iota {dimensions = array<i32: 0>} : vector<8x128xi32>
    %33 = tpu.iota {dimensions = array<i32: 1>} : vector<8x128xi32>
    %c128_i32 = arith.constant 128 : i32
    %34 = arith.muli %arg0, %c128_i32 : i32
    %35 = vector.broadcast %34 : i32 to vector<8x128xi32>
    %36 = arith.addi %33, %35 : vector<8x128xi32>
    %c0_15 = arith.constant 0 : index
    %37 = memref.load %arg1[%c0_15] : memref<1xi32, #tpu.memory_space<smem>>
    %c-1640531535_i32 = arith.constant -1640531535 : i32
    %38 = vector.broadcast %c-1640531535_i32 : i32 to vector<8x128xi32>
    %39 = arith.muli %32, %38 : vector<8x128xi32>
    %c-2048144777_i32 = arith.constant -2048144777 : i32
    %40 = vector.broadcast %c-2048144777_i32 : i32 to vector<8x128xi32>
    %41 = arith.muli %36, %40 : vector<8x128xi32>
    %42 = arith.xori %39, %41 : vector<8x128xi32>
    %43 = vector.broadcast %37 : i32 to vector<8x128xi32>
    %44 = arith.xori %42, %43 : vector<8x128xi32>
    %c16_i32 = arith.constant 16 : i32
    %45 = vector.broadcast %c16_i32 : i32 to vector<8x128xi32>
    %46 = arith.shrui %44, %45 : vector<8x128xi32>
    %47 = arith.xori %44, %46 : vector<8x128xi32>
    %c2146121005_i32 = arith.constant 2146121005 : i32
    %48 = vector.broadcast %c2146121005_i32 : i32 to vector<8x128xi32>
    %49 = arith.muli %47, %48 : vector<8x128xi32>
    %c15_i32 = arith.constant 15 : i32
    %50 = vector.broadcast %c15_i32 : i32 to vector<8x128xi32>
    %51 = arith.shrui %49, %50 : vector<8x128xi32>
    %52 = arith.xori %49, %51 : vector<8x128xi32>
    %c-2073254261_i32 = arith.constant -2073254261 : i32
    %53 = vector.broadcast %c-2073254261_i32 : i32 to vector<8x128xi32>
    %54 = arith.muli %52, %53 : vector<8x128xi32>
    %c16_i32_16 = arith.constant 16 : i32
    %55 = vector.broadcast %c16_i32_16 : i32 to vector<8x128xi32>
    %56 = arith.shrui %54, %55 : vector<8x128xi32>
    %57 = arith.xori %54, %56 : vector<8x128xi32>
    %c858993459_i32 = arith.constant 858993459 : i32
    %58 = vector.broadcast %c858993459_i32 : i32 to vector<8x128xi32>
    %59 = arith.cmpi uge, %57, %58 : vector<8x128xi32>
    %cst_17 = arith.constant 0.000000e+00 : f32
    %60 = vector.broadcast %cst_17 : f32 to vector<8x128xf32>
    %61 = arith.select %59, %31, %60 : vector<8x128xi1>, vector<8x128xf32>
    %c0_18 = arith.constant 0 : index
    %c0_19 = arith.constant 0 : index
    %62 = vector.load %arg7[%c0_18, %c0_19] : memref<8x128xf32, #tpu.memory_space<vmem>>, vector<8x128xf32>
    tpu.vector_store %arg7[%c0_18, %c0_19], %61 {strides = array<i32>} : memref<8x128xf32, #tpu.memory_space<vmem>>, vector<8x128xf32>,
    return
  }
  func.func @transform_0(%arg0: i32, %arg1: memref<1xi32, #tpu.memory_space<smem>>) -> (i32, i32) {
    %c0_i32 = arith.constant 0 : i32
    %c0_i32_0 = arith.constant 0 : i32
    %c0_i32_1 = arith.constant 0 : i32
    return %c0_i32, %c0_i32_0 : i32, i32
  }
  func.func @transform_1(%arg0: i32, %arg1: memref<1xi32, #tpu.memory_space<smem>>) -> (i32, i32) {
    %c0_i32 = arith.constant 0 : i32
    %c0_i32_0 = arith.constant 0 : i32
    return %arg0, %c0_i32 : i32, i32
  }
  func.func @transform_2(%arg0: i32, %arg1: memref<1xi32, #tpu.memory_space<smem>>) -> (i32, i32) {
    %c0_i32 = arith.constant 0 : i32
    %c0_i32_0 = arith.constant 0 : i32
    return %c0_i32, %arg0 : i32, i32
  }
  func.func @transform_3(%arg0: i32, %arg1: memref<1xi32, #tpu.memory_space<smem>>) -> (i32, i32) {
    %c0_i32 = arith.constant 0 : i32
    %c0_i32_0 = arith.constant 0 : i32
    return %c0_i32, %arg0 : i32, i32
  }
  func.func @transform_4(%arg0: i32, %arg1: memref<1xi32, #tpu.memory_space<smem>>) -> (i32, i32) {
    %c0_i32 = arith.constant 0 : i32
    %c0_i32_0 = arith.constant 0 : i32
    return %c0_i32, %arg0 : i32, i32
  }
  func.func @transform_5(%arg0: i32, %arg1: memref<1xi32, #tpu.memory_space<smem>>) -> (i32, i32) {
    %c0_i32 = arith.constant 0 : i32
    %c0_i32_0 = arith.constant 0 : i32
    return %c0_i32, %arg0 : i32, i32
  }
}

</mosaic_0001>

<llo_original>
// kernel: tpu_custom_call.1
$region0: #{tpu_custom_call.1}
  #allocation0 [shape = 'u32[]', space=smem, size = 0x4, offset = 0x4, fixed_abs, tag = 'smem constant byte address 0x4 - core index']
  #allocation1 [shape = 'u32[144,128]{1,0:T(1,128)}', space=vmem, size = 0x12000, scoped, tag = 'internal scratch']
  #allocation2 [shape = 's32[1]{0}', space=sflag, size = 0x4, scoped, tag = 'scoped memory for tpu_custom_call.1']
  #allocation3 [shape = 's32[1]{0:T(128)S(6)}', space=smem, size = 0x200, scoped, tag = 'prefetched SMEM operand 0']
  %s0 = inlined_call_operand.<no memory space> [shape: s32[1], index: 0, kind: input, shape index: {}]
  %s1 = inlined_call_operand.vmem [shape: f32[8,32], index: 1, kind: input, shape index: {}]
  %s2 = inlined_call_operand.vmem [shape: f32[128,32], index: 2, kind: input, shape index: {}]
  %s3 = inlined_call_operand.vmem [shape: f32[1,128], index: 3, kind: input, shape index: {}]
  %s4 = inlined_call_operand.vmem [shape: f32[1,128], index: 4, kind: input, shape index: {}]
  %s5 = inlined_call_operand.vmem [shape: f32[1,128], index: 5, kind: input, shape index: {}]
  %s6 = inlined_call_operand.hbm [shape: f32[8,128], index: 6, kind: output, shape index: {}]
  %s7 = sld [smem:[#allocation0]]
  $region30: #{tpu_custom_call.1} parent=0
    _
  %s9 = ssub.s32 1, %s7
  %s10 = scalar_select 0, %s9, %s7
  %11 = sst [smem:[#allocation3]] %s0
  $region1: #{tpu_custom_call.1} parent=0
    #allocation4 [shape = 'u8[4096]{0}', space=vmem, size = 0x1000, scoped, tag = 'output window, operand 0, single buffered']
    #allocation5 [shape = 's32[1]{0}', space=sflag, size = 0x4, scoped, tag = 'scoped memory for tpu_custom_call.1']
    %12 = vsyncpa [#allocation5], 0
    // Predicated region
    $region2: #{tpu_custom_call.1} parent=1 // pred_check
      _
    $region3: #{tpu_custom_call.1} parent=1 // pred_check_branch
      %14 = sbr.rel (0) target = $region5
    $region4: #{tpu_custom_call.1} parent=1 // pred_region
      _
    $region5: #{tpu_custom_call.1} parent=1 // pred_fallthru
      _
    // Predicated region
    $region6: #{tpu_custom_call.1} parent=1 // pred_check
      _
    $region7: #{tpu_custom_call.1} parent=1 // pred_check_branch
      %16 = sbr.rel (0) target = $region9
    $region8: #{tpu_custom_call.1} parent=1 // pred_region
      _
    $region9: #{tpu_custom_call.1} parent=1 // pred_fallthru
      _
    // Predicated region
    $region10: #{tpu_custom_call.1} parent=1 // pred_check
      _
    $region11: #{tpu_custom_call.1} parent=1 // pred_check_branch
      %18 = sbr.rel (0) target = $region13
    $region12: #{tpu_custom_call.1} parent=1 // pred_region
      _
    $region13: #{tpu_custom_call.1} parent=1 // pred_fallthru
      _
    // Predicated region
    $region14: #{tpu_custom_call.1} parent=1 // pred_check
      _
    $region15: #{tpu_custom_call.1} parent=1 // pred_check_branch
      %20 = sbr.rel (0) target = $region17
    $region16: #{tpu_custom_call.1} parent=1 // pred_region
      _
    $region17: #{tpu_custom_call.1} parent=1 // pred_fallthru
      _
    // Predicated region
    $region18: #{tpu_custom_call.1} parent=1 // pred_check
      _
    $region19: #{tpu_custom_call.1} parent=1 // pred_check_branch
      %22 = sbr.rel (0) target = $region21
    $region20: #{tpu_custom_call.1} parent=1 // pred_region
      _
    $region21: #{tpu_custom_call.1} parent=1 // pred_fallthru
      _
    %v24 = vld [vmem:[%s1] sm:$0xff]
    %v25 = vpack.c.bf16 %v24, %v24
    %v26 = vld [vmem:[%s2] sm:$0xff]
    %v27 = vld [vmem:[%s2 + $0x8] sm:$0xff]
    %v28 = vld [vmem:[%s2 + $0x10] sm:$0xff]
    %v29 = vld [vmem:[%s2 + $0x18] sm:$0xff]
    %v30 = vld [vmem:[%s2 + $0x20] sm:$0xff]
    %v31 = vld [vmem:[%s2 + $0x28] sm:$0xff]
    %v32 = vld [vmem:[%s2 + $0x30] sm:$0xff]
    %v33 = vld [vmem:[%s2 + $0x38] sm:$0xff]
    %v34 = vld [vmem:[%s2 + $0x40] sm:$0xff]
    %v35 = vld [vmem:[%s2 + $0x48] sm:$0xff]
    %v36 = vld [vmem:[%s2 + $0x50] sm:$0xff]
    %v37 = vld [vmem:[%s2 + $0x58] sm:$0xff]
    %v38 = vld [vmem:[%s2 + $0x60] sm:$0xff]
    %v39 = vld [vmem:[%s2 + $0x68] sm:$0xff]
    %v40 = vld [vmem:[%s2 + $0x70] sm:$0xff]
    %v41 = vld [vmem:[%s2 + $0x78] sm:$0xff]
    %v42 = vpack.c.bf16 %v27, %v26
    %v43 = vpack.c.bf16 %v29, %v28
    %v44 = vpack.c.bf16 %v31, %v30
    %v45 = vpack.c.bf16 %v33, %v32
    %v46 = vpack.c.bf16 %v35, %v34
    %v47 = vpack.c.bf16 %v37, %v36
    %v48 = vpack.c.bf16 %v39, %v38
    %v49 = vpack.c.bf16 %v41, %v40
    %v50 = vld [vmem:[%s3] sm:$0x1]
    %v52 = vlaneseq
    %v53 = vshrl.u32 %v52, 7
    %v54 = vsub.s32 0, %v53
    %v55 = vrot.slane %v50, %v54
    %vm57 = vcmask 261120
    %v59 = vsel %vm57, %v25, 0
    %v62 = vsel %vm57, %v42, 0
    %v65 = vsel %vm57, %v43, 0
    %v68 = vsel %vm57, %v44, 0
    %v71 = vsel %vm57, %v45, 0
    %v74 = vsel %vm57, %v46, 0
    %v77 = vsel %vm57, %v47, 0
    %v80 = vsel %vm57, %v48, 0
    %v83 = vsel %vm57, %v49, 0
    %85 = vmatprep.subr.bf16.mxu0 0
    %86 = vmatpush1.bf16.xpose.msra.mxu0 %v62
    %87 = vmatprep.subr.bf16.mxu0 0
    %88 = vmatpush1.bf16.xpose.msra.mxu0 %v65
    %89 = vmatprep.subr.bf16.mxu0 0
    %90 = vmatpush1.bf16.xpose.msra.mxu0 %v68
    %91 = vmatprep.subr.bf16.mxu0 0
    %92 = vmatpush1.bf16.xpose.msra.mxu0 %v71
    %93 = vmatprep.subr.bf16.mxu0 0
    %94 = vmatpush1.bf16.xpose.msra.mxu0 %v74
    %95 = vmatprep.subr.bf16.mxu0 0
    %96 = vmatpush1.bf16.xpose.msra.mxu0 %v77
    %97 = vmatprep.subr.bf16.mxu0 0
    %98 = vmatpush1.bf16.xpose.msra.mxu0 %v80
    %99 = vmatprep.subr.bf16.mxu0 0
    %100 = vmatpush1.bf16.xpose.msra.mxu0 %v83
    %101 = vmatprep.subr.bf16.mxu0 0
    %102 = vmatpush1.bf16.xpose.msra.mxu0 0
    %103 = vmatprep.subr.bf16.mxu0 0
    %104 = vmatpush1.bf16.xpose.msra.mxu0 0
    %105 = vmatprep.subr.bf16.mxu0 0
    %106 = vmatpush1.bf16.xpose.msra.mxu0 0
    %107 = vmatprep.subr.bf16.mxu0 0
    %108 = vmatpush1.bf16.xpose.msra.mxu0 0
    %109 = vmatprep.subr.bf16.mxu0 0
    %110 = vmatpush1.bf16.xpose.msra.mxu0 0
    %111 = vmatprep.subr.bf16.mxu0 0
    %112 = vmatpush1.bf16.xpose.msra.mxu0 0
    %113 = vmatprep.subr.bf16.mxu0 0
    %114 = vmatpush1.bf16.xpose.msra.mxu0 0
    %115 = vmatprep.subr.bf16.mxu0 0
    %116 = vmatpush1.bf16.xpose.msra.mxu0 0
    %117 = vmatprep.mubr.bf16.mxu0 0
    %118 = vmatmul.mubr.bf16.gmra.mrb[0].mxu0 %v59
    %v119 = vpop.f32.mrb[0].mxu0
    %v120 = vadd.f32 %v55, %v119
    %v121 = vpop.f32.mrb[0].mxu0
    %v122 = vpop.f32.mrb[0].mxu0
    %v123 = vpop.f32.mrb[0].mxu0
    %124 = vdwg.mxu0
    %v125 = vrot.slane %v120, 4
    %v126 = vadd.f32 %v120, %v125
    %v127 = vrot.slane %v126, 2
    %v128 = vadd.f32 %v126, %v127
    %v129 = vrot.slane %v128, 1
    %v130 = vadd.f32 %v128, %v129
    %v131 = vrcp.pop 8.0
    %v132 = vmul.f32 %v130, %v131
    %v133 = vsub.f32 %v120, %v132
    %v134 = vmul.f32 %v133, %v133
    %v135 = vrot.slane %v134, 4
    %v136 = vadd.f32 %v134, %v135
    %v137 = vrot.slane %v136, 2
    %v138 = vadd.f32 %v136, %v137
    %v139 = vrot.slane %v138, 1
    %v140 = vadd.f32 %v138, %v139
    %v141 = vmul.f32 %v140, %v131
    %v142 = vadd.f32 %v141, 1e-05
    %v143 = vrsqrt.pop %v142
    %v144 = vmul.f32 %v133, %v143
    %v145 = vld [vmem:[%s4] sm:$0x1]
    %v147 = vlaneseq
    %v148 = vshrl.u32 %v147, 7
    %v149 = vsub.s32 0, %v148
    %v150 = vrot.slane %v145, %v149
    %v152 = vmul.f32 %v144, %v150
    %v153 = vld [vmem:[%s5] sm:$0x1]
    %v155 = vlaneseq
    %v156 = vshrl.u32 %v155, 7
    %v157 = vsub.s32 0, %v156
    %v158 = vrot.slane %v153, %v157
    %v160 = vadd.f32 %v152, %v158
    %v161 = vmax.f32 %v160, 0.0
    %v162 = vlaneseq
    %v163 = vshrl.u32 %v162, 7
    %v164 = vlaneseq
    %v165 = vand.u32 %v164, 127
    %s166 = smul.u32 0, 128
    %v167 = vstv %s166
    %v168 = vadd.s32 %v165, %v167
    %s169 = sld [smem:[#allocation3]]
    %v170 = vmul.u32 %v163, 2654435761
    %v171 = vmul.u32 %v168, 2246822519
    %v172 = vxor.u32 %v170, %v171
    %v173 = vstv %s169
    %v174 = vxor.u32 %v172, %v173
    %v175 = vshrl.u32 %v174, 16
    %v176 = vxor.u32 %v174, %v175
    %v177 = vmul.u32 %v176, 2146121005
    %v178 = vshrl.u32 %v177, 15
    %v179 = vxor.u32 %v177, %v178
    %v180 = vmul.u32 %v179, 2221713035
    %v181 = vshrl.u32 %v180, 16
    %v182 = vxor.u32 %v180, %v181
    %vm183 = vcmp.ge.u32.totalorder %v182, 858993459
    %v184 = vsel %vm183, %v161, 0.0
    %185 = vst [vmem:[#allocation4] sm:$0xff] %v184
    // Predicated region
    $region22: #{tpu_custom_call.1} parent=1 // pred_check
      _
    $region23: #{tpu_custom_call.1} parent=1 // pred_check_branch
      %187 = sbr.rel (0) target = $region25
    $region24: #{tpu_custom_call.1} parent=1 // pred_region
      %s189 = ssub.s32 128, 128
      %190 = vsyncadd [#allocation5], %s189
      %s192 = sshll.u32 [#allocation4], 4
      %s193 = int_to_ptr.vmem [resolvable:$true] %s192
      %195 = dma.vmem_to_hbm [thread:$0]  %s193, 128, %s6, [#allocation5]
    $region25: #{tpu_custom_call.1} parent=1 // pred_fallthru
      _
    // Predicated region
    $region26: #{tpu_custom_call.1} parent=1 // pred_check
      _
    $region27: #{tpu_custom_call.1} parent=1 // pred_check_branch
      %197 = sbr.rel (0) target = $region29
    $region28: #{tpu_custom_call.1} parent=1 // pred_region
      %198 = dma.done [#allocation5], 128
    $region29: #{tpu_custom_call.1} parent=1 // pred_fallthru
      _
    %199 = vsyncpa [#allocation5], 1

</llo_original>
